<compile_context>
chip_gen: v7x
topology: tpu7x:2x2x1
jax: 0.10.0
libtpu: 0.0.40
codegen_flags: <defaults>
</compile_context>

<pallas_src>
import jax
import jax.numpy as jnp
from jax import lax
from jax.experimental import pallas as pl
from jax.experimental.pallas import tpu as pltpu


_NEG_BIG = -1e30  # finite "minus infinity" for padded vocab columns


def _round_up(x, m):
    return ((x + m - 1) // m) * m


def _pick_tile_v(V, F, B_pad, w_itemsize, target_tv, vmem_budget_bytes):
    """Largest lane-aligned vocab tile whose double-buffered weight stream plus
    the VMEM-resident arrays fit inside a conservative scoped-VMEM budget."""
    v128 = _round_up(V, 128)
    resident = v128 * 4                                # bias (1, V_pad) f32
    resident += B_pad * v128 * 4                       # output (B_pad, V_pad) f32
    resident += 2 * B_pad * max(F, 128) * w_itemsize   # x input (double-buffered)
    resident += 4 * B_pad * 128 * 4                    # LSE scratch (generous)
    avail = max(vmem_budget_bytes - resident, 2 * F * w_itemsize * 128)
    tv_max = avail // (2 * F * w_itemsize)             # double-buffered weight tile
    tv = min(int(target_tv), int(tv_max), v128)
    tv = max(128, (tv // 128) * 128)
    return tv


def cbow_kernel(x_ref, w_ref, b_ref, o_ref, m_ref, l_ref):
    """One grid step = one vocab tile.

    x_ref : VMEM (B_pad, F)       -- packed context vectors (resident)
    w_ref : VMEM (TV, F)          -- Linear weight tile, PyTorch (V, F) layout
    b_ref : VMEM (1, V_pad) f32   -- whole bias (resident)
    o_ref : VMEM (B_pad, V_pad)   -- whole output, resident across the grid
    m_ref : VMEM (B_pad, 1) f32   -- running max   (online logsumexp)
    l_ref : VMEM (B_pad, 1) f32   -- running sumexp (online logsumexp)
    """
    j = pl.program_id(0)
    nv = pl.num_programs(0)
    TV = w_ref.shape[0]

    @pl.when(j == 0)
    def _():
        m_ref[...] = jnp.full_like(m_ref, -jnp.inf)
        l_ref[...] = jnp.zeros_like(l_ref)

    # (B_pad, F) x (TV, F) contracted on F -> (B_pad, TV), f32 accumulate on MXU.
    logits = lax.dot_general(
        x_ref[...], w_ref[...],
        dimension_numbers=(((1,), (1,)), ((), ())),
        preferred_element_type=jnp.float32)

    start = pl.multiple_of(j * TV, 128)
    logits = logits + b_ref[:, pl.ds(start, TV)]        # bias sliced from resident copy
    o_ref[:, pl.ds(start, TV)] = logits                  # stash raw logits

    # Online logsumexp update (EUP exp / XLU reductions, off the VALU path).
    t_max = jnp.max(logits, axis=-1, keepdims=True)       # (B_pad, 1)
    m_new = jnp.maximum(m_ref[...], t_max)
    l_ref[...] = (l_ref[...] * jnp.exp(m_ref[...] - m_new)
                  + jnp.sum(jnp.exp(logits - m_new), axis=-1, keepdims=True))
    m_ref[...] = m_new

    # Last step: subtract the global LSE from the whole resident output.
    @pl.when(j == nv - 1)
    def _():
        lse = m_ref[...] + jnp.log(l_ref[...])             # (B_pad, 1)
        o_ref[...] = o_ref[...] - lse


def word_emb_cbow_forward(idx, emb_table, w_pt, b_pt, *,
                          tile_v=2048,
                          weight_dtype=jnp.float32,
                          vmem_budget_bytes=40 << 20):
    """Forward pass of WordEmbCbowNet.

    idx       : (C,) or (B, C) int32 -- context word ids
    emb_table : (V, E) float32       -- nn.Embedding weight
    w_pt      : (V, C*E) float32     -- nn.Linear weight (PyTorch layout, untransposed)
    b_pt      : (V,) float32         -- nn.Linear bias
    returns   : (B, V) float32 log-softmax  (B = 1 for the module's own forward)
    """
    V, E = emb_table.shape
    idx = jnp.asarray(idx, jnp.int32)
    if idx.ndim == 1:
        idx = idx[None, :]
    B, C = idx.shape
    F = C * E
    assert w_pt.shape == (V, F) and b_pt.shape == (V,)

    w_dtype = jnp.dtype(weight_dtype)

    # --- wrapper-side glue (tiny): embedding gather/concat, row/col padding ---
    # Only C rows of the table are ever needed; gathering here keeps the whole
    # (V, E) table out of VMEM entirely.
    x = jnp.take(emb_table, idx, axis=0).reshape(B, F).astype(w_dtype)   # (B, F)

    B_pad = _round_up(max(B, 1), 8)
    if B_pad != B:
        x = jnp.pad(x, ((0, B_pad - B), (0, 0)))

    TV = _pick_tile_v(V, F, B_pad, w_dtype.itemsize, tile_v, vmem_budget_bytes)
    V_pad = _round_up(V, TV)
    NV = V_pad // TV

    # Weight stays in PyTorch (V, F) layout -- no transpose. In a real pipeline
    # the bf16 cast would be done once at parameter-load time, not per call.
    w = w_pt.astype(w_dtype)
    b = b_pt.astype(jnp.float32).reshape(1, V)
    if V_pad != V:
        w = jnp.pad(w, ((0, V_pad - V), (0, 0)))
        b = jnp.pad(b, ((0, 0), (0, V_pad - V)), constant_values=_NEG_BIG)

    # Explicit scoped-VMEM limit derived from the same estimate (safe on v7x's
    # smaller 64 MiB VMEM as well as v5e/v6e's 128 MiB).
    need = (V_pad * 4
            + 2 * B_pad * V_pad * 4
            + 2 * B_pad * max(F, 128) * w_dtype.itemsize
            + 2 * TV * F * w_dtype.itemsize
            + (1 << 20))
    vmem_limit = int(min(48 << 20, max(2 * need, 8 << 20)))

    out = pl.pallas_call(
        cbow_kernel,
        out_shape=jax.ShapeDtypeStruct((B_pad, V_pad), jnp.float32),
        grid_spec=pltpu.PrefetchScalarGridSpec(
            num_scalar_prefetch=0,
            grid=(NV,),
            in_specs=[
                pl.BlockSpec((B_pad, F), lambda j: (0, 0)),    # activations, resident
                pl.BlockSpec((TV, F), lambda j: (j, 0)),       # weight tile, streamed over V
                pl.BlockSpec((1, V_pad), lambda j: (0, 0)),    # bias, resident
            ],
            out_specs=pl.BlockSpec((B_pad, V_pad), lambda j: (0, 0)),  # resident output
            scratch_shapes=[
                pltpu.VMEM((B_pad, 1), jnp.float32),   # running max
                pltpu.VMEM((B_pad, 1), jnp.float32),   # running sum-exp
            ],
        ),
        compiler_params=pltpu.CompilerParams(
            dimension_semantics=("arbitrary",),        # carries running softmax stats
            vmem_limit_bytes=vmem_limit,
        ),
    )(x, w, b)

    return out[:B, :V]


def _reference(idx, emb_table, w_pt, b_pt, cast_dtype=None):
    """Pure-JAX reference of the exact PyTorch forward (optionally with the
    same low-precision cast applied to the streamed operands)."""
    idx = jnp.asarray(idx, jnp.int32)
    if idx.ndim == 1:
        idx = idx[None, :]
    B = idx.shape[0]
    x = jnp.take(emb_table, idx, axis=0).reshape(B, -1)
    w = w_pt
    if cast_dtype is not None:
        x = x.astype(cast_dtype).astype(jnp.float32)
        w = w.astype(cast_dtype).astype(jnp.float32)
    logits = jnp.dot(x, w.T, precision=lax.Precision.HIGHEST) + b_pt[None, :]
    return jax.nn.log_softmax(logits, axis=-1)


if __name__ == "__main__":
    embedding_size = 32
    window_size = 2
    C = 2 * window_size                 # number of context words
    F = C * embedding_size              # linear in_features = 2*window*E = 128

    key = jax.random.PRNGKey(0)
    k_emb, k_w, k_b, k_idx, k_idx2 = jax.random.split(key, 5)

    # ------------------------------------------------------------------
    # Test 1: module-faithful forward (batch=1, f32 weights), V multiple of
    # 128, small tile_v to force a multi-step vocab grid (online LSE path).
    # ------------------------------------------------------------------
    V1 = 256
    emb1 = jax.random.normal(k_emb, (V1, embedding_size), dtype=jnp.float32)
    bound = 1.0 / (F ** 0.5)
    w1 = jax.random.uniform(k_w, (V1, F), minval=-bound, maxval=bound, dtype=jnp.float32)
    b1 = jax.random.uniform(k_b, (V1,), minval=-bound, maxval=bound, dtype=jnp.float32)
    idx1 = jax.random.randint(k_idx, (C,), 0, V1, dtype=jnp.int32)

    out1 = jax.block_until_ready(
        word_emb_cbow_forward(idx1, emb1, w1, b1, tile_v=128, weight_dtype=jnp.float32))
    ref1 = _reference(idx1, emb1, w1, b1)
    assert out1.shape == (1, V1) and out1.dtype == jnp.float32
    assert jnp.allclose(out1, ref1, atol=2e-3, rtol=1e-3), "f32 batch=1 mismatch"

    # ------------------------------------------------------------------
    # Test 2: bandwidth-optimized path -- bf16 weight stream, batched
    # contexts, non-multiple-of-128 vocab (exercises padding/masking).
    # ------------------------------------------------------------------
    V2, B2 = 300, 4
    emb2 = jax.random.normal(k_emb, (V2, embedding_size), dtype=jnp.float32)
    w2 = jax.random.uniform(k_w, (V2, F), minval=-bound, maxval=bound, dtype=jnp.float32)
    b2 = jax.random.uniform(k_b, (V2,), minval=-bound, maxval=bound, dtype=jnp.float32)
    idx2 = jax.random.randint(k_idx2, (B2, C), 0, V2, dtype=jnp.int32)

    out2 = jax.block_until_ready(
        word_emb_cbow_forward(idx2, emb2, w2, b2, weight_dtype=jnp.bfloat16))
    ref2 = _reference(idx2, emb2, w2, b2, cast_dtype=jnp.bfloat16)
    assert out2.shape == (B2, V2) and out2.dtype == jnp.float32
    assert jnp.allclose(out2, ref2, atol=3e-2, rtol=1e-2), "bf16 batched mismatch"

    print("KERNEL_OK")
</pallas_src>

<mosaic_0001>
module attributes {stable_mosaic.version = 11 : i64} {
  func.func @cbow_kernel(%arg0: i32, %arg1: memref<8x128xf32, #tpu.memory_space<vmem>>, %arg2: memref<128x128xf32, #tpu.memory_space<vmem>>, %arg3: memref<1x256xf32, #tpu.memory_space<vmem>>, %arg4: memref<8x256xf32, #tpu.memory_space<vmem>>, %arg5: memref<8x1xf32, #tpu.memory_space<vmem>>, %arg6: memref<8x1xf32, #tpu.memory_space<vmem>>) attributes {dimension_semantics = [#tpu.dimension_semantics<arbitrary>], iteration_bounds = array<i64: 2>, scalar_prefetch = 0 : i64, scratch_operands = 2 : i64, tpu.core_type = #tpu.core_type<tc>, window_params = [{pipeline_mode = #tpu.pipeline_mode<synchronous>, transform_indices = @transform_0, window_bounds = array<i64: 8, 128>}, {transform_indices = @transform_1, window_bounds = array<i64: 128, 128>}, {pipeline_mode = #tpu.pipeline_mode<synchronous>, transform_indices = @transform_2, window_bounds = array<i64: 1, 256>}, {pipeline_mode = #tpu.pipeline_mode<synchronous>, transform_indices = @transform_3, window_bounds = array<i64: 8, 256>}]} {
    %c0_i32 = arith.constant 0 : i32
    %0 = arith.cmpi eq, %arg0, %c0_i32 : i32
    %1 = arith.extui %0 : i1 to i32
    %c0_i32_0 = arith.constant 0 : i32
    %2 = arith.cmpi ne, %1, %c0_i32_0 : i32
    scf.if %2 {
      %cst_19 = arith.constant 0xFF800000 : f32
      %34 = vector.broadcast %cst_19 : f32 to vector<8x1xf32>
      %c0_20 = arith.constant 0 : index
      %c0_21 = arith.constant 0 : index
      %35 = vector.load %arg5[%c0_20, %c0_21] : memref<8x1xf32, #tpu.memory_space<vmem>>, vector<8x1xf32>
      tpu.vector_store %arg5[%c0_20, %c0_21], %34 {strides = array<i32>} : memref<8x1xf32, #tpu.memory_space<vmem>>, vector<8x1xf32>,
      %cst_22 = arith.constant 0.000000e+00 : f32
      %36 = vector.broadcast %cst_22 : f32 to vector<8x1xf32>
      %c0_23 = arith.constant 0 : index
      %c0_24 = arith.constant 0 : index
      %37 = vector.load %arg6[%c0_23, %c0_24] : memref<8x1xf32, #tpu.memory_space<vmem>>, vector<8x1xf32>
      tpu.vector_store %arg6[%c0_23, %c0_24], %36 {strides = array<i32>} : memref<8x1xf32, #tpu.memory_space<vmem>>, vector<8x1xf32>,
    } else {
    }
    %c0 = arith.constant 0 : index
    %c0_1 = arith.constant 0 : index
    %3 = vector.load %arg1[%c0, %c0_1] : memref<8x128xf32, #tpu.memory_space<vmem>>, vector<8x128xf32>
    %c0_2 = arith.constant 0 : index
    %c0_3 = arith.constant 0 : index
    %4 = vector.load %arg2[%c0_2, %c0_3] : memref<128x128xf32, #tpu.memory_space<vmem>>, vector<128x128xf32>
    %cst = arith.constant dense<0.000000e+00> : vector<8x128xf32>
    %5 = tpu.matmul %3, %4, %cst {dimension_numbers = #tpu.dot_dimension_numbers<[1], [1], [0], [0], [0, 0, 1, 0], [], []>} : vector<8x128xf32>, vector<128x128xf32>, vector<8x128xf32> -> vector<8x128xf32>
    %c128_i32 = arith.constant 128 : i32
    %6 = arith.muli %arg0, %c128_i32 : i32
    %7 = tpu.assume_multiple %6, 128 : i32
    %c0_4 = arith.constant 0 : index
    %8 = arith.index_cast %7 : i32 to index
    %9 = vector.load %arg3[%c0_4, %8] : memref<1x256xf32, #tpu.memory_space<vmem>>, vector<1x128xf32>
    %10 = vector.broadcast %9 : vector<1x128xf32> to vector<8x128xf32>
    %11 = arith.addf %5, %10 : vector<8x128xf32>
    %c0_5 = arith.constant 0 : index
    %12 = arith.index_cast %7 : i32 to index
    %13 = vector.load %arg4[%c0_5, %12] : memref<8x256xf32, #tpu.memory_space<vmem>>, vector<8x128xf32>
    tpu.vector_store %arg4[%c0_5, %12], %11 {strides = array<i32>} : memref<8x256xf32, #tpu.memory_space<vmem>>, vector<8x128xf32>,
    %cst_6 = arith.constant dense<0xFF800000> : vector<8xf32>
    %14 = vector.multi_reduction <maximumf>, %11, %cst_6 [1] : vector<8x128xf32> to vector<8xf32>
    %15 = vector.shape_cast %14 : vector<8xf32> to vector<8x1xf32>
    %c0_7 = arith.constant 0 : index
    %c0_8 = arith.constant 0 : index
    %16 = vector.load %arg5[%c0_7, %c0_8] : memref<8x1xf32, #tpu.memory_space<vmem>>, vector<8x1xf32>
    %17 = arith.maximumf %16, %15 : vector<8x1xf32>
    %c0_9 = arith.constant 0 : index
    %c0_10 = arith.constant 0 : index
    %18 = vector.load %arg6[%c0_9, %c0_10] : memref<8x1xf32, #tpu.memory_space<vmem>>, vector<8x1xf32>
    %c0_11 = arith.constant 0 : index
    %c0_12 = arith.constant 0 : index
    %19 = vector.load %arg5[%c0_11, %c0_12] : memref<8x1xf32, #tpu.memory_space<vmem>>, vector<8x1xf32>
    %20 = arith.subf %19, %17 : vector<8x1xf32>
    %21 = math.exp %20 : vector<8x1xf32>
    %22 = arith.mulf %18, %21 : vector<8x1xf32>
    %23 = vector.broadcast %17 : vector<8x1xf32> to vector<8x128xf32>
    %24 = arith.subf %11, %23 : vector<8x128xf32>
    %25 = math.exp %24 : vector<8x128xf32>
    %cst_13 = arith.constant dense<0.000000e+00> : vector<8xf32>
    %26 = vector.multi_reduction <add>, %25, %cst_13 [1] : vector<8x128xf32> to vector<8xf32>
    %27 = vector.shape_cast %26 : vector<8xf32> to vector<8x1xf32>
    %28 = arith.addf %22, %27 : vector<8x1xf32>
    %c0_14 = arith.constant 0 : index
    %c0_15 = arith.constant 0 : index
    %29 = vector.load %arg6[%c0_14, %c0_15] : memref<8x1xf32, #tpu.memory_space<vmem>>, vector<8x1xf32>
    tpu.vector_store %arg6[%c0_14, %c0_15], %28 {strides = array<i32>} : memref<8x1xf32, #tpu.memory_space<vmem>>, vector<8x1xf32>,
    %c0_16 = arith.constant 0 : index
    %c0_17 = arith.constant 0 : index
    %30 = vector.load %arg5[%c0_16, %c0_17] : memref<8x1xf32, #tpu.memory_space<vmem>>, vector<8x1xf32>
    tpu.vector_store %arg5[%c0_16, %c0_17], %17 {strides = array<i32>} : memref<8x1xf32, #tpu.memory_space<vmem>>, vector<8x1xf32>,
    %c1_i32 = arith.constant 1 : i32
    %31 = arith.cmpi eq, %arg0, %c1_i32 : i32
    %32 = arith.extui %31 : i1 to i32
    %c0_i32_18 = arith.constant 0 : i32
    %33 = arith.cmpi ne, %32, %c0_i32_18 : i32
    scf.if %33 {
      %c0_19 = arith.constant 0 : index
      %c0_20 = arith.constant 0 : index
      %34 = vector.load %arg5[%c0_19, %c0_20] : memref<8x1xf32, #tpu.memory_space<vmem>>, vector<8x1xf32>
      %c0_21 = arith.constant 0 : index
      %c0_22 = arith.constant 0 : index
      %35 = vector.load %arg6[%c0_21, %c0_22] : memref<8x1xf32, #tpu.memory_space<vmem>>, vector<8x1xf32>
      %36 = math.log %35 : vector<8x1xf32>
      %37 = arith.addf %34, %36 : vector<8x1xf32>
      %c0_23 = arith.constant 0 : index
      %c0_24 = arith.constant 0 : index
      %38 = vector.load %arg4[%c0_23, %c0_24] : memref<8x256xf32, #tpu.memory_space<vmem>>, vector<8x256xf32>
      %39 = vector.broadcast %37 : vector<8x1xf32> to vector<8x256xf32>
      %40 = arith.subf %38, %39 : vector<8x256xf32>
      %c0_25 = arith.constant 0 : index
      %c0_26 = arith.constant 0 : index
      %41 = vector.load %arg4[%c0_25, %c0_26] : memref<8x256xf32, #tpu.memory_space<vmem>>, vector<8x256xf32>
      tpu.vector_store %arg4[%c0_25, %c0_26], %40 {strides = array<i32>} : memref<8x256xf32, #tpu.memory_space<vmem>>, vector<8x256xf32>,
    } else {
    }
    return
  }
  func.func @transform_0(%arg0: i32) -> (i32, i32) {
    %c0_i32 = arith.constant 0 : i32
    %c0_i32_0 = arith.constant 0 : i32
    %c0_i32_1 = arith.constant 0 : i32
    return %c0_i32, %c0_i32_0 : i32, i32
  }
  func.func @transform_1(%arg0: i32) -> (i32, i32) {
    %c0_i32 = arith.constant 0 : i32
    %c0_i32_0 = arith.constant 0 : i32
    return %arg0, %c0_i32 : i32, i32
  }
  func.func @transform_2(%arg0: i32) -> (i32, i32) {
    %c0_i32 = arith.constant 0 : i32
    %c0_i32_0 = arith.constant 0 : i32
    %c0_i32_1 = arith.constant 0 : i32
    return %c0_i32, %c0_i32_0 : i32, i32
  }
  func.func @transform_3(%arg0: i32) -> (i32, i32) {
    %c0_i32 = arith.constant 0 : i32
    %c0_i32_0 = arith.constant 0 : i32
    %c0_i32_1 = arith.constant 0 : i32
    return %c0_i32, %c0_i32_0 : i32, i32
  }
}

</mosaic_0001>

<llo_original>
// kernel: tpu_custom_call.1
$region0: #{tpu_custom_call.1}
  #allocation0 [shape = 'u32[]', space=smem, size = 0x4, offset = 0x4, fixed_abs, tag = 'smem constant byte address 0x4 - core index']
  #allocation1 [shape = 'u32[144,128]{1,0:T(1,128)}', space=vmem, size = 0x12000, scoped, tag = 'internal scratch']
  #allocation2 [shape = 'f32[8,1]{1,0:T(8,128)}', space=vmem, size = 0x1000, scoped, tag = 'scratch operand']
  #allocation3 [shape = 'f32[8,1]{1,0:T(8,128)}', space=vmem, size = 0x1000, scoped, tag = 'scratch operand']
  %s0 = inlined_call_operand.hbm [shape: f32[8,128], index: 0, kind: input, shape index: {}]
  %s1 = inlined_call_operand.hbm [shape: f32[256,128], index: 1, kind: input, shape index: {}]
  %s2 = inlined_call_operand.vmem [shape: f32[1,256], index: 2, kind: input, shape index: {}]
  %s3 = inlined_call_operand.hbm [shape: f32[8,256], index: 3, kind: output, shape index: {}]
  %s4 = sld [smem:[#allocation0]]
  $region61: #{tpu_custom_call.1} parent=0
    _
  %s6 = ssub.s32 1, %s4
  %s7 = scalar_select 0, %s6, %s4
  $region1: #{tpu_custom_call.1} parent=0
    #allocation4 [shape = 'u8[4096]{0}', space=vmem, size = 0x1000, scoped, tag = 'input window, operand 0, single buffered']
    #allocation5 [shape = 's32[2]{0}', space=sflag, size = 0x8, scoped, tag = 'scoped memory for tpu_custom_call.1']
    #allocation6 [shape = 's32[2]{0}', space=sflag, size = 0x8, scoped, tag = 'scoped memory for tpu_custom_call.1']
    #allocation7 [shape = 'u8[131072]{0}', space=vmem, size = 0x20000, scoped, tag = 'input window, operand 1']
    #allocation8 [shape = 's32[2]{0}', space=sflag, size = 0x8, scoped, tag = 'scoped memory for tpu_custom_call.1']
    #allocation9 [shape = 'u8[8192]{0}', space=vmem, size = 0x2000, scoped, tag = 'output window, operand 0, single buffered']
    %8 = vsyncpa [#allocation5], 0
    %9 = vsyncpa [#allocation8], 0
    %s10 = scalar_lea.sflag [#allocation8], 1
    %11 = vsyncpa %s10, 0
    %12 = vsyncpa [#allocation6], 0
    loop: start=0, step=1, limit=4
    $region2: #{tpu_custom_call.1} parent=1 // loop_pre_header
      _
    $region3: #{tpu_custom_call.1} parent=1 // loop_header
      %s14 = sphi 0, %s18
      %p15 = scmp.ge.s32.totalorder %s14, 4
      %s22 = sphi 0, %s22
      %s24 = sphi 0, %s22
      %s25 = sphi 0, %s24
      %s39 = sphi 0, %s25
      %s45 = sphi 0, %s47
      %s48 = sphi 0, %s45
      %s49 = sphi 0, %s48
      %s65 = sphi 0, %s49
      %s69 = sphi 0, %s69
      %s71 = sphi 0, %s69
      %s72 = sphi 0, %s71
      %s86 = sphi 0, %s72
      %s90 = sphi 0, %s90
      %s92 = sphi 0, %s90
      %s93 = sphi 0, %s92
      %s107 = sphi 0, %s93
    $region4: #{tpu_custom_call.1} parent=1 // loop_header_branch
      %17 = sbr.rel (%p15) target = $region8
    $region5: #{tpu_custom_call.1} parent=1 // loop_body
      %s19 = ssub.s32 %s14, 1
      %s20 = ssub.s32 %s14, 2
      %s21 = sadd.s32 %s14, 1
      %s23 = sadd.s32 %s22, 1
      %p26 = scmp.eq.s32.totalorder %s14, 1
      %p27 = scmp.ne.s32.totalorder %s22, %s24
      %p28 = scmp.eq.s32.totalorder %s14, 0
      %p29 = por %p27, %p28
      %p30 = scmp.ne.s32.totalorder %s22, %s24
      %p31 = scmp.eq.s32.totalorder %s19, 1
      %p32 = por %p30, %p31
      %p33 = scmp.ne.s32.totalorder %s24, %s25
      %p34 = scmp.eq.s32.totalorder %s19, 0
      %p35 = por %p33, %p34
      %p36 = scmp.ne.s32.totalorder %s24, %s25
      %p37 = scmp.eq.s32.totalorder %s20, 1
      %p38 = por %p36, %p37
      %p40 = scmp.ne.s32.totalorder %s25, %s39
      %p41 = scmp.eq.s32.totalorder %s20, 0
      %p42 = por %p40, %p41
      %s43 = ssub.s32 %s14, %s21
      %p44 = scmp.eq.s32.totalorder %s43, 0
      %s46 = sadd.s32 %s45, 1
      %s47 = scalar_select %p44, %s45, %s46
      %p50 = pneg %p44
      %p51 = scmp.eq.s32.totalorder %s14, 1
      %p52 = por %p50, %p51
      %p53 = scmp.ne.s32.totalorder %s45, %s48
      %p54 = scmp.eq.s32.totalorder %s14, 0
      %p55 = por %p53, %p54
      %p56 = scmp.ne.s32.totalorder %s45, %s48
      %p57 = scmp.eq.s32.totalorder %s19, 1
      %p58 = por %p56, %p57
      %p59 = scmp.ne.s32.totalorder %s48, %s49
      %p60 = scmp.eq.s32.totalorder %s19, 0
      %p61 = por %p59, %p60
      %p62 = scmp.ne.s32.totalorder %s48, %s49
      %p63 = scmp.eq.s32.totalorder %s20, 1
      %p64 = por %p62, %p63
      %p66 = scmp.ne.s32.totalorder %s49, %s65
      %p67 = scmp.eq.s32.totalorder %s20, 0
      %p68 = por %p66, %p67
      %s70 = sadd.s32 %s69, 1
      %p73 = scmp.eq.s32.totalorder %s14, 1
      %p74 = scmp.ne.s32.totalorder %s69, %s71
      %p75 = scmp.eq.s32.totalorder %s14, 0
      %p76 = por %p74, %p75
      %p77 = scmp.ne.s32.totalorder %s69, %s71
      %p78 = scmp.eq.s32.totalorder %s19, 1
      %p79 = por %p77, %p78
      %p80 = scmp.ne.s32.totalorder %s71, %s72
      %p81 = scmp.eq.s32.totalorder %s19, 0
      %p82 = por %p80, %p81
      %p83 = scmp.ne.s32.totalorder %s71, %s72
      %p84 = scmp.eq.s32.totalorder %s20, 1
      %p85 = por %p83, %p84
      %p87 = scmp.ne.s32.totalorder %s72, %s86
      %p88 = scmp.eq.s32.totalorder %s20, 0
      %p89 = por %p87, %p88
      %s91 = sadd.s32 %s90, 1
      %p94 = scmp.eq.s32.totalorder %s14, 1
      %p95 = scmp.ne.s32.totalorder %s90, %s92
      %p96 = scmp.eq.s32.totalorder %s14, 0
      %p97 = por %p95, %p96
      %p98 = scmp.ne.s32.totalorder %s90, %s92
      %p99 = scmp.eq.s32.totalorder %s19, 1
      %p100 = por %p98, %p99
      %p101 = scmp.ne.s32.totalorder %s92, %s93
      %p102 = scmp.eq.s32.totalorder %s19, 0
      %p103 = por %p101, %p102
      %p104 = scmp.ne.s32.totalorder %s92, %s93
      %p105 = scmp.eq.s32.totalorder %s20, 1
      %p106 = por %p104, %p105
      %p108 = scmp.ne.s32.totalorder %s93, %s107
      %p109 = scmp.eq.s32.totalorder %s20, 0
      %p110 = por %p108, %p109
      %p111 = scmp.le.s32.totalorder 1, %s14
      %p112 = scmp.lt.s32.totalorder %s14, 3
      %p113 = pnand %p111, %p112
      %p114 = pneg %p113
      // Predicated region
      $region9: #{tpu_custom_call.1} parent=5 // pred_check
        _
      $region10: #{tpu_custom_call.1} parent=5 // pred_check_branch
        %116 = sbr.rel (%p113) target = $region12
      $region11: #{tpu_custom_call.1} parent=5 // pred_region
        %s117 = ssub.s32 %s14, 1
        // Predicated region
        $region13: #{tpu_custom_call.1} parent=11 // pred_check
          %p118 = pneg %p35
        $region14: #{tpu_custom_call.1} parent=11 // pred_check_branch
          %120 = sbr.rel (%p118) target = $region16
        $region15: #{tpu_custom_call.1} parent=11 // pred_region
          %s122 = ssub.s32 128, 128
          %123 = vsyncadd [#allocation5], %s122
          %s125 = sshll.u32 [#allocation4], 4
          %s126 = int_to_ptr.vmem [resolvable:$true] %s125
          %128 = dma.hbm_to_vmem [thread:$0]  %s0, 128, %s126, [#allocation5]
        $region16: #{tpu_custom_call.1} parent=11 // pred_fallthru
          _
        // Predicated region
        $region17: #{tpu_custom_call.1} parent=11 // pred_check
          %p129 = pneg %p82
        $region18: #{tpu_custom_call.1} parent=11 // pred_check_branch
          %131 = sbr.rel (%p129) target = $region20
        $region19: #{tpu_custom_call.1} parent=11 // pred_region
          _
        $region20: #{tpu_custom_call.1} parent=11 // pred_fallthru
          _
      $region12: #{tpu_custom_call.1} parent=5 // pred_fallthru
        _
      %p132 = scmp.lt.s32.totalorder %s14, 2
      // Predicated region
      $region21: #{tpu_custom_call.1} parent=5 // pred_check
        %p133 = pneg %p132
      $region22: #{tpu_custom_call.1} parent=5 // pred_check_branch
        %135 = sbr.rel (%p133) target = $region24
      $region23: #{tpu_custom_call.1} parent=5 // pred_region
        // Predicated region
        $region25: #{tpu_custom_call.1} parent=23 // pred_check
          %p136 = pneg %p55
        $region26: #{tpu_custom_call.1} parent=23 // pred_check_branch
          %138 = sbr.rel (%p136) target = $region28
        $region27: #{tpu_custom_call.1} parent=23 // pred_region
          %s139 = sand.u32 %s45, 1
          %s140 = scalar_lea.sflag [#allocation8], %s139
          %s141 = sand.u32 %s45, 1
          %s142 = smul.addr %s141, 128
          %s143 = scalar_lea.vmem [#allocation7], %s142
          %s144 = smul.u32 16, %s14
          %s146 = ssub.s32 2048, 2048
          %147 = vsyncadd %s140, %s146
          %s148 = smul.addr %s144, 128
          %s149 = scalar_lea.hbm %s1, %s148
          %s150 = sshll.u32 %s143, 4
          %s151 = int_to_ptr.vmem [resolvable:$true] %s150
          %156 = dma.hbm_to_vmem [thread:$0]  %s149, 2048, %s151, %s140, 128, 128, 8
        $region28: #{tpu_custom_call.1} parent=23 // pred_fallthru
          _
      $region24: #{tpu_custom_call.1} parent=5 // pred_fallthru
        _
      %p157 = scmp.le.s32.totalorder 1, %s14
      %p158 = scmp.lt.s32.totalorder %s14, 3
      %p159 = pnand %p157, %p158
      %p160 = pneg %p159
      // Predicated region
      $region29: #{tpu_custom_call.1} parent=5 // pred_check
        _
      $region30: #{tpu_custom_call.1} parent=5 // pred_check_branch
        %162 = sbr.rel (%p159) target = $region32
      $region31: #{tpu_custom_call.1} parent=5 // pred_region
        %s163 = ssub.s32 %s14, 1
        // Predicated region
        $region33: #{tpu_custom_call.1} parent=31 // pred_check
          %p164 = pneg %p35
        $region34: #{tpu_custom_call.1} parent=31 // pred_check_branch
          %166 = sbr.rel (%p164) target = $region36
        $region35: #{tpu_custom_call.1} parent=31 // pred_region
          %167 = dma.done [#allocation5], 128
        $region36: #{tpu_custom_call.1} parent=31 // pred_fallthru
          _
        %s168 = sand.u32 %s48, 1
        %s169 = scalar_lea.sflag [#allocation8], %s168
        %s170 = sand.u32 %s48, 1
        %s171 = smul.addr %s170, 128
        %s172 = scalar_lea.vmem [#allocation7], %s171
        // Predicated region
        $region37: #{tpu_custom_call.1} parent=31 // pred_check
          %p173 = pneg %p61
        $region38: #{tpu_custom_call.1} parent=31 // pred_check_branch
          %175 = sbr.rel (%p173) target = $region40
        $region39: #{tpu_custom_call.1} parent=31 // pred_region
          %176 = dma.done %s169, 2048
        $region40: #{tpu_custom_call.1} parent=31 // pred_fallthru
          _
        %p177 = pneg %p35
        %p178 = pneg %p32
        %s179 = sand.u32 %s48, 1
        %s180 = scalar_lea.sflag [#allocation8], %s179
        %s181 = sand.u32 %s48, 1
        %s182 = smul.addr %s181, 128
        %s183 = scalar_lea.vmem [#allocation7], %s182
        %p184 = pneg %p61
        %p185 = pneg %p58
        %p186 = pneg %p82
        %p187 = pneg %p79
        %p188 = pneg %p103
        %p189 = pneg %p100
        %s190 = smul.u32 16, %s19
        %p191 = scmp.eq.s32.totalorder %s19, 0
        // Predicated region
        $region41: #{tpu_custom_call.1} parent=31 // pred_check
          %p192 = pneg %p191
        $region42: #{tpu_custom_call.1} parent=31 // pred_check_branch
          %194 = sbr.rel (%p192) target = $region44
        $region43: #{tpu_custom_call.1} parent=31 // pred_region
          %vm195 = vcmask 7168
          %196 = vst.msk [vmem:[#allocation2] sm:$0xff] %vm195, -inf
          %197 = vst.msk [vmem:[#allocation3] sm:$0xff] %vm195, 0.0
        $region44: #{tpu_custom_call.1} parent=31 // pred_fallthru
          _
        %v198 = vld [vmem:[#allocation4] sm:$0xff]
        %v199 = vld [vmem:[%s172] sm:$0xff]
        %v200 = vld [vmem:[%s172 + $0x8] sm:$0xff]
        %v201 = vld [vmem:[%s172 + $0x10] sm:$0xff]
        %v202 = vld [vmem:[%s172 + $0x18] sm:$0xff]
        %v203 = vld [vmem:[%s172 + $0x20] sm:$0xff]
        %v204 = vld [vmem:[%s172 + $0x28] sm:$0xff]
        %v205 = vld [vmem:[%s172 + $0x30] sm:$0xff]
        %v206 = vld [vmem:[%s172 + $0x38] sm:$0xff]
        %v207 = vld [vmem:[%s172 + $0x40] sm:$0xff]
        %v208 = vld [vmem:[%s172 + $0x48] sm:$0xff]
        %v209 = vld [vmem:[%s172 + $0x50] sm:$0xff]
        %v210 = vld [vmem:[%s172 + $0x58] sm:$0xff]
        %v211 = vld [vmem:[%s172 + $0x60] sm:$0xff]
        %v212 = vld [vmem:[%s172 + $0x68] sm:$0xff]
        %v213 = vld [vmem:[%s172 + $0x70] sm:$0xff]
        %v214 = vld [vmem:[%s172 + $0x78] sm:$0xff]
        %s215 = smul.u32 %s19, 128
        %s216 = sshra.s32 %s215, 7
        %s217 = sand.u32 %s215, 127
        %s218 = scalar_lea.vmem %s2, %s216
        %v219 = vld [vmem:[%s218] sm:$0x1]
        %v221 = vlaneseq
        %v222 = vshrl.u32 %v221, 7
        %v223 = vsub.s32 0, %v222
        %v224 = vrot.slane %v219, %v223
        %226 = vmatprep.subr.mxu0 0.0
        %227 = vmatpush1.xpose.msra.mxu0 %v199
        %228 = vmatprep.subr.mxu0 0.0
        %229 = vmatpush1.xpose.msra.mxu0 %v200
        %230 = vmatprep.subr.mxu0 0.0
        %231 = vmatpush1.xpose.msra.mxu0 %v201
        %232 = vmatprep.subr.mxu0 0.0
        %233 = vmatpush1.xpose.msra.mxu0 %v202
        %234 = vmatprep.subr.mxu0 0.0
        %235 = vmatpush1.xpose.msra.mxu0 %v203
        %236 = vmatprep.subr.mxu0 0.0
        %237 = vmatpush1.xpose.msra.mxu0 %v204
        %238 = vmatprep.subr.mxu0 0.0
        %239 = vmatpush1.xpose.msra.mxu0 %v205
        %240 = vmatprep.subr.mxu0 0.0
        %241 = vmatpush1.xpose.msra.mxu0 %v206
        %242 = vmatprep.subr.mxu0 0.0
        %243 = vmatpush1.xpose.msra.mxu0 %v207
        %244 = vmatprep.subr.mxu0 0.0
        %245 = vmatpush1.xpose.msra.mxu0 %v208
        %246 = vmatprep.subr.mxu0 0.0
        %247 = vmatpush1.xpose.msra.mxu0 %v209
        %248 = vmatprep.subr.mxu0 0.0
        %249 = vmatpush1.xpose.msra.mxu0 %v210
        %250 = vmatprep.subr.mxu0 0.0
        %251 = vmatpush1.xpose.msra.mxu0 %v211
        %252 = vmatprep.subr.mxu0 0.0
        %253 = vmatpush1.xpose.msra.mxu0 %v212
        %254 = vmatprep.subr.mxu0 0.0
        %255 = vmatpush1.xpose.msra.mxu0 %v213
        %256 = vmatprep.subr.mxu0 0.0
        %257 = vmatpush1.xpose.msra.mxu0 %v214
        %258 = vmatprep.subr.mxu0 0.0
        %259 = vmatpush1.xpose.msra.mxu0 0.0
        %260 = vmatprep.subr.mxu0 0.0
        %261 = vmatpush1.xpose.msra.mxu0 0.0
        %262 = vmatprep.subr.mxu0 0.0
        %263 = vmatpush1.xpose.msra.mxu0 0.0
        %264 = vmatprep.subr.mxu0 0.0
        %265 = vmatpush1.xpose.msra.mxu0 0.0
        %266 = vmatprep.subr.mxu0 0.0
        %267 = vmatpush1.xpose.msra.mxu0 0.0
        %268 = vmatprep.subr.mxu0 0.0
        %269 = vmatpush1.xpose.msra.mxu0 0.0
        %270 = vmatprep.subr.mxu0 0.0
        %271 = vmatpush1.xpose.msra.mxu0 0.0
        %272 = vmatprep.subr.mxu0 0.0
        %273 = vmatpush1.xpose.msra.mxu0 0.0
        %274 = vmatprep.subr.mxu0 0.0
        %275 = vmatpush1.xpose.msra.mxu0 0.0
        %276 = vmatprep.subr.mxu0 0.0
        %277 = vmatpush1.xpose.msra.mxu0 0.0
        %278 = vmatprep.subr.mxu0 0.0
        %279 = vmatpush1.xpose.msra.mxu0 0.0
        %280 = vmatprep.subr.mxu0 0.0
        %281 = vmatpush1.xpose.msra.mxu0 0.0
        %282 = vmatprep.subr.mxu0 0.0
        %283 = vmatpush1.xpose.msra.mxu0 0.0
        %284 = vmatprep.subr.mxu0 0.0
        %285 = vmatpush1.xpose.msra.mxu0 0.0
        %286 = vmatprep.subr.mxu0 0.0
        %287 = vmatpush1.xpose.msra.mxu0 0.0
        %288 = vmatprep.subr.mxu0 0.0
        %289 = vmatpush1.xpose.msra.mxu0 0.0
        %290 = vmatprep.mubr.f32.mxu0 0.0
        %291 = vmatmul.mubr.f32.gmra.mrb[0].mxu0 %v198
        %v292 = vpop.f32.mrb[0].mxu0
        %v293 = vadd.f32 %v224, %v292
        %v294 = vpop.f32.mrb[0].mxu0
        %295 = vdwg.mxu0
        %s296 = smul.addr %s216, 8
        %s297 = scalar_lea.vmem [#allocation9], %s296
        %298 = vst [vmem:[%s297] sm:$0xff] %v293
        %299 = vmax.xlane.f32.xlu0 %v293
        %v300 = vpop.xlane.xlu0 %299
        %v301 = vld [vmem:[#allocation2] sm:$0xff]
        %v302 = vmax.f32 %v301, %v300
        %v303 = vld [vmem:[#allocation3] sm:$0xff]
        %v304 = vsub.f32 %v301, %v302
        %v305 = vmul.f32 %v304, 1.442695
        %v306 = vpow.pop %v305
        %v307 = vmul.f32 %v303, %v306
        %309 = vset.pattern.permute.xlu0 0
        %310 = vperm.xlu0 %309, %v302
        %v311 = vpop.permute.xlu0 %310
        %v313 = vsub.f32 %v293, %v311
        %v314 = vmul.f32 %v313, 1.442695
        %v315 = vpow.pop %v314
        %316 = vadd.xlane.f32.xlu0 %v315
        %v317 = vpop.xlane.xlu0 %316
        %v318 = vadd.f32 %v307, %v317
        %vm319 = vcmask 7168
        %320 = vst.msk [vmem:[#allocation3] sm:$0xff] %vm319, %v318
        %321 = vst.msk [vmem:[#allocation2] sm:$0xff] %vm319, %v302
        %p322 = scmp.eq.s32.totalorder %s19, 1
        // Predicated region
        $region45: #{tpu_custom_call.1} parent=31 // pred_check
          %p323 = pneg %p322
        $region46: #{tpu_custom_call.1} parent=31 // pred_check_branch
          %325 = sbr.rel (%p323) target = $region48
        $region47: #{tpu_custom_call.1} parent=31 // pred_region
          %v326 = vld [vmem:[#allocation2] sm:$0xff]
          %v327 = vld [vmem:[#allocation3] sm:$0xff]
          %v328 = vlog2.pop %v327
          %v329 = vmul.f32 %v328, 0.6931472
          %v330 = vadd.f32 %v326, %v329
          %v331 = vld [vmem:[#allocation9] sm:$0xff]
          %v332 = vld [vmem:[#allocation9 + $0x8] sm:$0xff]
          %334 = vset.pattern.permute.xlu0 0
          %335 = vperm.xlu0 %334, %v330
          %v336 = vpop.permute.xlu0 %335
          %v338 = vsub.f32 %v331, %v336
          %v339 = vsub.f32 %v332, %v336
          %340 = vst [vmem:[#allocation9] sm:$0xff] %v338
          %341 = vst [vmem:[#allocation9 + $0x8] sm:$0xff] %v339
        $region48: #{tpu_custom_call.1} parent=31 // pred_fallthru
          _
        // Predicated region
        $region49: #{tpu_custom_call.1} parent=31 // pred_check
          %p342 = pneg %p100
        $region50: #{tpu_custom_call.1} parent=31 // pred_check_branch
          %344 = sbr.rel (%p342) target = $region52
        $region51: #{tpu_custom_call.1} parent=31 // pred_region
          %s346 = ssub.s32 256, 256
          %347 = vsyncadd [#allocation6], %s346
          %s349 = sshll.u32 [#allocation9], 4
          %s350 = int_to_ptr.vmem [resolvable:$true] %s349
          %352 = dma.vmem_to_hbm [thread:$0]  %s350, 256, %s3, [#allocation6]
        $region52: #{tpu_custom_call.1} parent=31 // pred_fallthru
          _
        // Predicated region
        $region53: #{tpu_custom_call.1} parent=31 // pred_check
          %p353 = pneg %p100
        $region54: #{tpu_custom_call.1} parent=31 // pred_check_branch
          %355 = sbr.rel (%p353) target = $region56
        $region55: #{tpu_custom_call.1} parent=31 // pred_region
          %356 = dma.done [#allocation6], 256
        $region56: #{tpu_custom_call.1} parent=31 // pred_fallthru
          _
      $region32: #{tpu_custom_call.1} parent=5 // pred_fallthru
        _
      %p357 = scmp.le.s32.totalorder 2, %s14
      // Predicated region
      $region57: #{tpu_custom_call.1} parent=5 // pred_check
        %p358 = pneg %p357
      $region58: #{tpu_custom_call.1} parent=5 // pred_check_branch
        %360 = sbr.rel (%p358) target = $region60
      $region59: #{tpu_custom_call.1} parent=5 // pred_region
        %s361 = ssub.s32 %s14, 2
      $region60: #{tpu_custom_call.1} parent=5 // pred_fallthru
        _
    $region6: #{tpu_custom_call.1} parent=1 // loop_footer
      %s18 = sadd.s32 1, %s14
    $region7: #{tpu_custom_call.1} parent=1 // loop_footer_branch
      %13 = sbr.rel target = $region3
    $region8: #{tpu_custom_call.1} parent=1 // loop_exit
      _
    %362 = vsyncpa [#allocation5], 1
    %s363 = scalar_lea.sflag [#allocation5], 1
    %364 = vsyncpa %s363, 1
    %365 = vsyncpa [#allocation8], 1
    %s366 = scalar_lea.sflag [#allocation8], 1
    %367 = vsyncpa %s366, 1
    %368 = vsyncpa [#allocation6], 1
    %s369 = scalar_lea.sflag [#allocation6], 1
    %370 = vsyncpa %s369, 1

</llo_original>
